<compile_context>
chip_gen: v6e
topology: v6e:2x2x1
jax: 0.10.0
libtpu: 0.0.40
codegen_flags: <defaults>
</compile_context>

<pallas_src>
import jax
import jax.numpy as jnp
from jax import lax
from jax.experimental import pallas as pl
from jax.experimental.pallas import tpu as pltpu


def lstm_linear_kernel(xproj_ref, whh_ref, wlin_ref, blin_ref, out_ref):
    """Serial LSTM recurrence over precomputed input projections + final Linear.

    xproj_ref : (T, B, 4H)  x_t @ W_ih^T + (b_ih + b_hh), time-major
    whh_ref   : (H, 4H)     W_hh^T
    wlin_ref  : (H, 1)      last row of W_lin, transposed
    blin_ref  : (1, 1)      last element of b_lin
    out_ref   : (B, 1)      out[:, -1, -1] per batch element
    """
    T, B, _ = xproj_ref.shape
    H = whh_ref.shape[0]

    whh = whh_ref[...]                                   # (H, 4H), load once
    h = jnp.zeros((B, H), jnp.float32)
    c = jnp.zeros((B, H), jnp.float32)

    # Static unroll over time: T is a compile-time constant, h/c stay in vregs.
    for t in range(T):
        gates = xproj_ref[t] + jnp.dot(h, whh,
                                       preferred_element_type=jnp.float32)  # (B, 4H)
        sig = jax.nn.sigmoid(gates)                      # full-width EUP op
        tnh = jnp.tanh(gates)                            # full-width EUP op
        i_g = sig[:, 0 * H:1 * H]
        f_g = sig[:, 1 * H:2 * H]
        g_g = tnh[:, 2 * H:3 * H]
        o_g = sig[:, 3 * H:4 * H]
        c = f_g * c + i_g * g_g
        h = o_g * jnp.tanh(c)

    out_ref[...] = (jnp.dot(h, wlin_ref[...], preferred_element_type=jnp.float32)
                    + blin_ref[...])


def net_forward(x, params):
    """x: (B, T, I) float32, batch_first like the PyTorch module. Returns (B,)."""
    B, T, I = x.shape
    w_ih, w_hh = params["w_ih"], params["w_hh"]          # (4H, I), (4H, H)
    b_ih, b_hh = params["b_ih"], params["b_hh"]          # (4H,), (4H,)
    w_lin, b_lin = params["w_lin"], params["b_lin"]      # (O, H), (O,)
    H = w_hh.shape[1]

    # Hoisted (off the serial chain) input projection for all timesteps.
    # Fuses the batch_first -> time-major transpose into the einsum.
    b = (b_ih + b_hh).astype(jnp.float32)
    xproj = (jnp.einsum("bti,gi->tbg", x.astype(jnp.float32),
                        w_ih.astype(jnp.float32))
             + b[None, None, :])                          # (T, B, 4H)

    whh_t = jnp.transpose(w_hh).astype(jnp.float32)       # (H, 4H)
    # out[:, -1, -1] only needs the last Linear output feature.
    wlin_col = jnp.transpose(w_lin[-1:, :]).astype(jnp.float32)   # (H, 1)
    blin = b_lin[-1].reshape(1, 1).astype(jnp.float32)            # (1, 1)

    vmem = pl.BlockSpec(memory_space=pltpu.MemorySpace.VMEM)
    out = pl.pallas_call(
        lstm_linear_kernel,
        out_shape=jax.ShapeDtypeStruct((B, 1), jnp.float32),
        in_specs=[vmem] * 4,
        out_specs=vmem,
    )(xproj, whh_t, wlin_col, blin)

    return out[:, 0]


def net_reference(x, params):
    """Pure-JAX (XLA) reference of the PyTorch forward, for verification."""
    B, T, I = x.shape
    H = params["w_hh"].shape[1]
    w_ih, w_hh = params["w_ih"], params["w_hh"]
    b = params["b_ih"] + params["b_hh"]

    def step(carry, x_t):
        h, c = carry
        gates = x_t @ w_ih.T + h @ w_hh.T + b
        i_g = jax.nn.sigmoid(gates[:, 0 * H:1 * H])
        f_g = jax.nn.sigmoid(gates[:, 1 * H:2 * H])
        g_g = jnp.tanh(gates[:, 2 * H:3 * H])
        o_g = jax.nn.sigmoid(gates[:, 3 * H:4 * H])
        c = f_g * c + i_g * g_g
        h = o_g * jnp.tanh(c)
        return (h, c), None

    init = (jnp.zeros((B, H), jnp.float32), jnp.zeros((B, H), jnp.float32))
    (h_T, _), _ = lax.scan(step, init, jnp.transpose(x, (1, 0, 2)))
    out = h_T @ params["w_lin"].T + params["b_lin"]
    return out[:, -1]


def init_params(key, input_size, hidden_size, output_size):
    """Deterministic PyTorch-style uniform(-1/sqrt(H), 1/sqrt(H)) init."""
    k = 1.0 / jnp.sqrt(jnp.float32(hidden_size))
    keys = jax.random.split(key, 6)
    u = lambda kk, shape: jax.random.uniform(kk, shape, jnp.float32, -k, k)
    return {
        "w_ih": u(keys[0], (4 * hidden_size, input_size)),
        "w_hh": u(keys[1], (4 * hidden_size, hidden_size)),
        "b_ih": u(keys[2], (4 * hidden_size,)),
        "b_hh": u(keys[3], (4 * hidden_size,)),
        "w_lin": u(keys[4], (output_size, hidden_size)),
        "b_lin": u(keys[5], (output_size,)),
    }


if __name__ == "__main__":
    # Small shapes consistent with Net(input_=4, hidden_=32, out_=4, batch_=2)
    batch, seq, input_size, hidden_size, output_size = 2, 8, 4, 32, 4

    key = jax.random.PRNGKey(0)
    k_params, k_x = jax.random.split(key)
    params = init_params(k_params, input_size, hidden_size, output_size)
    x = jax.random.normal(k_x, (batch, seq, input_size), dtype=jnp.float32)

    y = net_forward(x, params)          # shape (batch,)
    jax.block_until_ready(y)
    assert y.shape == (batch,)

    y_ref = net_reference(x, params)
    assert jnp.allclose(y, y_ref, rtol=1e-5, atol=1e-5), (y, y_ref)

    print("KERNEL_OK")
</pallas_src>

<mosaic_0001>
module attributes {stable_mosaic.version = 11 : i64} {
  func.func @lstm_linear_kernel(%arg0: memref<8x2x128xf32, #tpu.memory_space<vmem>>, %arg1: memref<32x128xf32, #tpu.memory_space<vmem>>, %arg2: memref<32x1xf32, #tpu.memory_space<vmem>>, %arg3: memref<1x1xf32, #tpu.memory_space<vmem>>, %arg4: memref<2x1xf32, #tpu.memory_space<vmem>>) attributes {dimension_semantics = [], scalar_prefetch = 0 : i64, scratch_operands = 0 : i64, tpu.core_type = #tpu.core_type<tc>} {
    %c0 = arith.constant 0 : index
    %c0_0 = arith.constant 0 : index
    %0 = vector.load %arg1[%c0, %c0_0] : memref<32x128xf32, #tpu.memory_space<vmem>>, vector<32x128xf32>
    %cst = arith.constant 0.000000e+00 : f32
    %1 = vector.broadcast %cst : f32 to vector<2x32xf32>
    %cst_1 = arith.constant 0.000000e+00 : f32
    %2 = vector.broadcast %cst_1 : f32 to vector<2x32xf32>
    %c0_2 = arith.constant 0 : index
    %c0_3 = arith.constant 0 : index
    %c0_4 = arith.constant 0 : index
    %3 = vector.load %arg0[%c0_2, %c0_3, %c0_4] : memref<8x2x128xf32, #tpu.memory_space<vmem>>, vector<1x2x128xf32>
    %4 = vector.shape_cast %3 : vector<1x2x128xf32> to vector<2x128xf32>
    %cst_5 = arith.constant dense<0.000000e+00> : vector<2x128xf32>
    %5 = tpu.matmul %1, %0, %cst_5 {dimension_numbers = #tpu.dot_dimension_numbers<[1], [0], [0], [1], [0, 0, 1, 1], [], []>} : vector<2x32xf32>, vector<32x128xf32>, vector<2x128xf32> -> vector<2x128xf32>
    %6 = arith.addf %4, %5 : vector<2x128xf32>
    %7 = arith.negf %6 : vector<2x128xf32>
    %8 = math.exp %7 : vector<2x128xf32>
    %cst_6 = arith.constant 1.000000e+00 : f32
    %9 = vector.broadcast %cst_6 : f32 to vector<2x128xf32>
    %10 = arith.addf %9, %8 : vector<2x128xf32>
    %11 = arith.divf %9, %10 : vector<2x128xf32>
    %12 = math.tanh %6 : vector<2x128xf32>
    %13 = vector.extract_strided_slice %11 {offsets = [0, 0], sizes = [2, 32], strides = [1, 1]} : vector<2x128xf32> to vector<2x32xf32>
    %14 = vector.extract_strided_slice %11 {offsets = [0, 32], sizes = [2, 32], strides = [1, 1]} : vector<2x128xf32> to vector<2x32xf32>
    %15 = vector.extract_strided_slice %12 {offsets = [0, 64], sizes = [2, 32], strides = [1, 1]} : vector<2x128xf32> to vector<2x32xf32>
    %16 = vector.extract_strided_slice %11 {offsets = [0, 96], sizes = [2, 32], strides = [1, 1]} : vector<2x128xf32> to vector<2x32xf32>
    %17 = arith.mulf %14, %2 : vector<2x32xf32>
    %18 = arith.mulf %13, %15 : vector<2x32xf32>
    %19 = arith.addf %17, %18 : vector<2x32xf32>
    %20 = math.tanh %19 : vector<2x32xf32>
    %21 = arith.mulf %16, %20 : vector<2x32xf32>
    %c1 = arith.constant 1 : index
    %c0_7 = arith.constant 0 : index
    %c0_8 = arith.constant 0 : index
    %22 = vector.load %arg0[%c1, %c0_7, %c0_8] : memref<8x2x128xf32, #tpu.memory_space<vmem>>, vector<1x2x128xf32>
    %23 = vector.shape_cast %22 : vector<1x2x128xf32> to vector<2x128xf32>
    %cst_9 = arith.constant dense<0.000000e+00> : vector<2x128xf32>
    %24 = tpu.matmul %21, %0, %cst_9 {dimension_numbers = #tpu.dot_dimension_numbers<[1], [0], [0], [1], [0, 0, 1, 1], [], []>} : vector<2x32xf32>, vector<32x128xf32>, vector<2x128xf32> -> vector<2x128xf32>
    %25 = arith.addf %23, %24 : vector<2x128xf32>
    %26 = arith.negf %25 : vector<2x128xf32>
    %27 = math.exp %26 : vector<2x128xf32>
    %cst_10 = arith.constant 1.000000e+00 : f32
    %28 = vector.broadcast %cst_10 : f32 to vector<2x128xf32>
    %29 = arith.addf %28, %27 : vector<2x128xf32>
    %30 = arith.divf %28, %29 : vector<2x128xf32>
    %31 = math.tanh %25 : vector<2x128xf32>
    %32 = vector.extract_strided_slice %30 {offsets = [0, 0], sizes = [2, 32], strides = [1, 1]} : vector<2x128xf32> to vector<2x32xf32>
    %33 = vector.extract_strided_slice %30 {offsets = [0, 32], sizes = [2, 32], strides = [1, 1]} : vector<2x128xf32> to vector<2x32xf32>
    %34 = vector.extract_strided_slice %31 {offsets = [0, 64], sizes = [2, 32], strides = [1, 1]} : vector<2x128xf32> to vector<2x32xf32>
    %35 = vector.extract_strided_slice %30 {offsets = [0, 96], sizes = [2, 32], strides = [1, 1]} : vector<2x128xf32> to vector<2x32xf32>
    %36 = arith.mulf %33, %19 : vector<2x32xf32>
    %37 = arith.mulf %32, %34 : vector<2x32xf32>
    %38 = arith.addf %36, %37 : vector<2x32xf32>
    %39 = math.tanh %38 : vector<2x32xf32>
    %40 = arith.mulf %35, %39 : vector<2x32xf32>
    %c2 = arith.constant 2 : index
    %c0_11 = arith.constant 0 : index
    %c0_12 = arith.constant 0 : index
    %41 = vector.load %arg0[%c2, %c0_11, %c0_12] : memref<8x2x128xf32, #tpu.memory_space<vmem>>, vector<1x2x128xf32>
    %42 = vector.shape_cast %41 : vector<1x2x128xf32> to vector<2x128xf32>
    %cst_13 = arith.constant dense<0.000000e+00> : vector<2x128xf32>
    %43 = tpu.matmul %40, %0, %cst_13 {dimension_numbers = #tpu.dot_dimension_numbers<[1], [0], [0], [1], [0, 0, 1, 1], [], []>} : vector<2x32xf32>, vector<32x128xf32>, vector<2x128xf32> -> vector<2x128xf32>
    %44 = arith.addf %42, %43 : vector<2x128xf32>
    %45 = arith.negf %44 : vector<2x128xf32>
    %46 = math.exp %45 : vector<2x128xf32>
    %cst_14 = arith.constant 1.000000e+00 : f32
    %47 = vector.broadcast %cst_14 : f32 to vector<2x128xf32>
    %48 = arith.addf %47, %46 : vector<2x128xf32>
    %49 = arith.divf %47, %48 : vector<2x128xf32>
    %50 = math.tanh %44 : vector<2x128xf32>
    %51 = vector.extract_strided_slice %49 {offsets = [0, 0], sizes = [2, 32], strides = [1, 1]} : vector<2x128xf32> to vector<2x32xf32>
    %52 = vector.extract_strided_slice %49 {offsets = [0, 32], sizes = [2, 32], strides = [1, 1]} : vector<2x128xf32> to vector<2x32xf32>
    %53 = vector.extract_strided_slice %50 {offsets = [0, 64], sizes = [2, 32], strides = [1, 1]} : vector<2x128xf32> to vector<2x32xf32>
    %54 = vector.extract_strided_slice %49 {offsets = [0, 96], sizes = [2, 32], strides = [1, 1]} : vector<2x128xf32> to vector<2x32xf32>
    %55 = arith.mulf %52, %38 : vector<2x32xf32>
    %56 = arith.mulf %51, %53 : vector<2x32xf32>
    %57 = arith.addf %55, %56 : vector<2x32xf32>
    %58 = math.tanh %57 : vector<2x32xf32>
    %59 = arith.mulf %54, %58 : vector<2x32xf32>
    %c3 = arith.constant 3 : index
    %c0_15 = arith.constant 0 : index
    %c0_16 = arith.constant 0 : index
    %60 = vector.load %arg0[%c3, %c0_15, %c0_16] : memref<8x2x128xf32, #tpu.memory_space<vmem>>, vector<1x2x128xf32>
    %61 = vector.shape_cast %60 : vector<1x2x128xf32> to vector<2x128xf32>
    %cst_17 = arith.constant dense<0.000000e+00> : vector<2x128xf32>
    %62 = tpu.matmul %59, %0, %cst_17 {dimension_numbers = #tpu.dot_dimension_numbers<[1], [0], [0], [1], [0, 0, 1, 1], [], []>} : vector<2x32xf32>, vector<32x128xf32>, vector<2x128xf32> -> vector<2x128xf32>
    %63 = arith.addf %61, %62 : vector<2x128xf32>
    %64 = arith.negf %63 : vector<2x128xf32>
    %65 = math.exp %64 : vector<2x128xf32>
    %cst_18 = arith.constant 1.000000e+00 : f32
    %66 = vector.broadcast %cst_18 : f32 to vector<2x128xf32>
    %67 = arith.addf %66, %65 : vector<2x128xf32>
    %68 = arith.divf %66, %67 : vector<2x128xf32>
    %69 = math.tanh %63 : vector<2x128xf32>
    %70 = vector.extract_strided_slice %68 {offsets = [0, 0], sizes = [2, 32], strides = [1, 1]} : vector<2x128xf32> to vector<2x32xf32>
    %71 = vector.extract_strided_slice %68 {offsets = [0, 32], sizes = [2, 32], strides = [1, 1]} : vector<2x128xf32> to vector<2x32xf32>
    %72 = vector.extract_strided_slice %69 {offsets = [0, 64], sizes = [2, 32], strides = [1, 1]} : vector<2x128xf32> to vector<2x32xf32>
    %73 = vector.extract_strided_slice %68 {offsets = [0, 96], sizes = [2, 32], strides = [1, 1]} : vector<2x128xf32> to vector<2x32xf32>
    %74 = arith.mulf %71, %57 : vector<2x32xf32>
    %75 = arith.mulf %70, %72 : vector<2x32xf32>
    %76 = arith.addf %74, %75 : vector<2x32xf32>
    %77 = math.tanh %76 : vector<2x32xf32>
    %78 = arith.mulf %73, %77 : vector<2x32xf32>
    %c4 = arith.constant 4 : index
    %c0_19 = arith.constant 0 : index
    %c0_20 = arith.constant 0 : index
    %79 = vector.load %arg0[%c4, %c0_19, %c0_20] : memref<8x2x128xf32, #tpu.memory_space<vmem>>, vector<1x2x128xf32>
    %80 = vector.shape_cast %79 : vector<1x2x128xf32> to vector<2x128xf32>
    %cst_21 = arith.constant dense<0.000000e+00> : vector<2x128xf32>
    %81 = tpu.matmul %78, %0, %cst_21 {dimension_numbers = #tpu.dot_dimension_numbers<[1], [0], [0], [1], [0, 0, 1, 1], [], []>} : vector<2x32xf32>, vector<32x128xf32>, vector<2x128xf32> -> vector<2x128xf32>
    %82 = arith.addf %80, %81 : vector<2x128xf32>
    %83 = arith.negf %82 : vector<2x128xf32>
    %84 = math.exp %83 : vector<2x128xf32>
    %cst_22 = arith.constant 1.000000e+00 : f32
    %85 = vector.broadcast %cst_22 : f32 to vector<2x128xf32>
    %86 = arith.addf %85, %84 : vector<2x128xf32>
    %87 = arith.divf %85, %86 : vector<2x128xf32>
    %88 = math.tanh %82 : vector<2x128xf32>
    %89 = vector.extract_strided_slice %87 {offsets = [0, 0], sizes = [2, 32], strides = [1, 1]} : vector<2x128xf32> to vector<2x32xf32>
    %90 = vector.extract_strided_slice %87 {offsets = [0, 32], sizes = [2, 32], strides = [1, 1]} : vector<2x128xf32> to vector<2x32xf32>
    %91 = vector.extract_strided_slice %88 {offsets = [0, 64], sizes = [2, 32], strides = [1, 1]} : vector<2x128xf32> to vector<2x32xf32>
    %92 = vector.extract_strided_slice %87 {offsets = [0, 96], sizes = [2, 32], strides = [1, 1]} : vector<2x128xf32> to vector<2x32xf32>
    %93 = arith.mulf %90, %76 : vector<2x32xf32>
    %94 = arith.mulf %89, %91 : vector<2x32xf32>
    %95 = arith.addf %93, %94 : vector<2x32xf32>
    %96 = math.tanh %95 : vector<2x32xf32>
    %97 = arith.mulf %92, %96 : vector<2x32xf32>
    %c5 = arith.constant 5 : index
    %c0_23 = arith.constant 0 : index
    %c0_24 = arith.constant 0 : index
    %98 = vector.load %arg0[%c5, %c0_23, %c0_24] : memref<8x2x128xf32, #tpu.memory_space<vmem>>, vector<1x2x128xf32>
    %99 = vector.shape_cast %98 : vector<1x2x128xf32> to vector<2x128xf32>
    %cst_25 = arith.constant dense<0.000000e+00> : vector<2x128xf32>
    %100 = tpu.matmul %97, %0, %cst_25 {dimension_numbers = #tpu.dot_dimension_numbers<[1], [0], [0], [1], [0, 0, 1, 1], [], []>} : vector<2x32xf32>, vector<32x128xf32>, vector<2x128xf32> -> vector<2x128xf32>
    %101 = arith.addf %99, %100 : vector<2x128xf32>
    %102 = arith.negf %101 : vector<2x128xf32>
    %103 = math.exp %102 : vector<2x128xf32>
    %cst_26 = arith.constant 1.000000e+00 : f32
    %104 = vector.broadcast %cst_26 : f32 to vector<2x128xf32>
    %105 = arith.addf %104, %103 : vector<2x128xf32>
    %106 = arith.divf %104, %105 : vector<2x128xf32>
    %107 = math.tanh %101 : vector<2x128xf32>
    %108 = vector.extract_strided_slice %106 {offsets = [0, 0], sizes = [2, 32], strides = [1, 1]} : vector<2x128xf32> to vector<2x32xf32>
    %109 = vector.extract_strided_slice %106 {offsets = [0, 32], sizes = [2, 32], strides = [1, 1]} : vector<2x128xf32> to vector<2x32xf32>
    %110 = vector.extract_strided_slice %107 {offsets = [0, 64], sizes = [2, 32], strides = [1, 1]} : vector<2x128xf32> to vector<2x32xf32>
    %111 = vector.extract_strided_slice %106 {offsets = [0, 96], sizes = [2, 32], strides = [1, 1]} : vector<2x128xf32> to vector<2x32xf32>
    %112 = arith.mulf %109, %95 : vector<2x32xf32>
    %113 = arith.mulf %108, %110 : vector<2x32xf32>
    %114 = arith.addf %112, %113 : vector<2x32xf32>
    %115 = math.tanh %114 : vector<2x32xf32>
    %116 = arith.mulf %111, %115 : vector<2x32xf32>
    %c6 = arith.constant 6 : index
    %c0_27 = arith.constant 0 : index
    %c0_28 = arith.constant 0 : index
    %117 = vector.load %arg0[%c6, %c0_27, %c0_28] : memref<8x2x128xf32, #tpu.memory_space<vmem>>, vector<1x2x128xf32>
    %118 = vector.shape_cast %117 : vector<1x2x128xf32> to vector<2x128xf32>
    %cst_29 = arith.constant dense<0.000000e+00> : vector<2x128xf32>
    %119 = tpu.matmul %116, %0, %cst_29 {dimension_numbers = #tpu.dot_dimension_numbers<[1], [0], [0], [1], [0, 0, 1, 1], [], []>} : vector<2x32xf32>, vector<32x128xf32>, vector<2x128xf32> -> vector<2x128xf32>
    %120 = arith.addf %118, %119 : vector<2x128xf32>
    %121 = arith.negf %120 : vector<2x128xf32>
    %122 = math.exp %121 : vector<2x128xf32>
    %cst_30 = arith.constant 1.000000e+00 : f32
    %123 = vector.broadcast %cst_30 : f32 to vector<2x128xf32>
    %124 = arith.addf %123, %122 : vector<2x128xf32>
    %125 = arith.divf %123, %124 : vector<2x128xf32>
    %126 = math.tanh %120 : vector<2x128xf32>
    %127 = vector.extract_strided_slice %125 {offsets = [0, 0], sizes = [2, 32], strides = [1, 1]} : vector<2x128xf32> to vector<2x32xf32>
    %128 = vector.extract_strided_slice %125 {offsets = [0, 32], sizes = [2, 32], strides = [1, 1]} : vector<2x128xf32> to vector<2x32xf32>
    %129 = vector.extract_strided_slice %126 {offsets = [0, 64], sizes = [2, 32], strides = [1, 1]} : vector<2x128xf32> to vector<2x32xf32>
    %130 = vector.extract_strided_slice %125 {offsets = [0, 96], sizes = [2, 32], strides = [1, 1]} : vector<2x128xf32> to vector<2x32xf32>
    %131 = arith.mulf %128, %114 : vector<2x32xf32>
    %132 = arith.mulf %127, %129 : vector<2x32xf32>
    %133 = arith.addf %131, %132 : vector<2x32xf32>
    %134 = math.tanh %133 : vector<2x32xf32>
    %135 = arith.mulf %130, %134 : vector<2x32xf32>
    %c7 = arith.constant 7 : index
    %c0_31 = arith.constant 0 : index
    %c0_32 = arith.constant 0 : index
    %136 = vector.load %arg0[%c7, %c0_31, %c0_32] : memref<8x2x128xf32, #tpu.memory_space<vmem>>, vector<1x2x128xf32>
    %137 = vector.shape_cast %136 : vector<1x2x128xf32> to vector<2x128xf32>
    %cst_33 = arith.constant dense<0.000000e+00> : vector<2x128xf32>
    %138 = tpu.matmul %135, %0, %cst_33 {dimension_numbers = #tpu.dot_dimension_numbers<[1], [0], [0], [1], [0, 0, 1, 1], [], []>} : vector<2x32xf32>, vector<32x128xf32>, vector<2x128xf32> -> vector<2x128xf32>
    %139 = arith.addf %137, %138 : vector<2x128xf32>
    %140 = arith.negf %139 : vector<2x128xf32>
    %141 = math.exp %140 : vector<2x128xf32>
    %cst_34 = arith.constant 1.000000e+00 : f32
    %142 = vector.broadcast %cst_34 : f32 to vector<2x128xf32>
    %143 = arith.addf %142, %141 : vector<2x128xf32>
    %144 = arith.divf %142, %143 : vector<2x128xf32>
    %145 = math.tanh %139 : vector<2x128xf32>
    %146 = vector.extract_strided_slice %144 {offsets = [0, 0], sizes = [2, 32], strides = [1, 1]} : vector<2x128xf32> to vector<2x32xf32>
    %147 = vector.extract_strided_slice %144 {offsets = [0, 32], sizes = [2, 32], strides = [1, 1]} : vector<2x128xf32> to vector<2x32xf32>
    %148 = vector.extract_strided_slice %145 {offsets = [0, 64], sizes = [2, 32], strides = [1, 1]} : vector<2x128xf32> to vector<2x32xf32>
    %149 = vector.extract_strided_slice %144 {offsets = [0, 96], sizes = [2, 32], strides = [1, 1]} : vector<2x128xf32> to vector<2x32xf32>
    %150 = arith.mulf %147, %133 : vector<2x32xf32>
    %151 = arith.mulf %146, %148 : vector<2x32xf32>
    %152 = arith.addf %150, %151 : vector<2x32xf32>
    %153 = math.tanh %152 : vector<2x32xf32>
    %154 = arith.mulf %149, %153 : vector<2x32xf32>
    %c0_35 = arith.constant 0 : index
    %c0_36 = arith.constant 0 : index
    %155 = vector.load %arg2[%c0_35, %c0_36] : memref<32x1xf32, #tpu.memory_space<vmem>>, vector<32x1xf32>
    %cst_37 = arith.constant dense<0.000000e+00> : vector<2x1xf32>
    %156 = tpu.matmul %154, %155, %cst_37 {dimension_numbers = #tpu.dot_dimension_numbers<[1], [0], [0], [1], [0, 0, 1, 1], [], []>} : vector<2x32xf32>, vector<32x1xf32>, vector<2x1xf32> -> vector<2x1xf32>
    %c0_38 = arith.constant 0 : index
    %c0_39 = arith.constant 0 : index
    %157 = vector.load %arg3[%c0_38, %c0_39] : memref<1x1xf32, #tpu.memory_space<vmem>>, vector<1x1xf32>
    %158 = vector.broadcast %157 : vector<1x1xf32> to vector<2x1xf32>
    %159 = arith.addf %156, %158 : vector<2x1xf32>
    %c0_40 = arith.constant 0 : index
    %c0_41 = arith.constant 0 : index
    %160 = vector.load %arg4[%c0_40, %c0_41] : memref<2x1xf32, #tpu.memory_space<vmem>>, vector<2x1xf32>
    tpu.vector_store %arg4[%c0_40, %c0_41], %159 {strides = array<i32>} : memref<2x1xf32, #tpu.memory_space<vmem>>, vector<2x1xf32>,
    return
  }
}

</mosaic_0001>

<llo_original>
// kernel: tpu_custom_call.1
$region0: #{tpu_custom_call.1}
  #allocation0 [shape = 'u32[]', space=smem, size = 0x4, offset = 0x4, fixed_abs, tag = 'smem constant byte address 0x4 - core index']
  #allocation1 [shape = 'u32[144,128]{1,0:T(1,128)}', space=vmem, size = 0x12000, scoped, tag = 'internal scratch']
  #allocation2 [shape = 'f32[1,1]{1,0:T(1,128)S(1)}', space=vmem, size = 0x200, scoped, tag = 'scoped memory for tpu_custom_call.1']
  %s0 = inlined_call_operand.hbm [shape: f32[8,2,128], index: 0, kind: input, shape index: {}]
  %s1 = inlined_call_operand.vmem [shape: f32[32,128], index: 1, kind: input, shape index: {}]
  %s2 = inlined_call_operand.vmem [shape: f32[32,1], index: 2, kind: input, shape index: {}]
  %s3 = inlined_call_operand.<no memory space> [shape: f32[1,1], index: 3, kind: input, shape index: {}]
  %s4 = inlined_call_operand.vmem [shape: f32[2,1], index: 4, kind: output, shape index: {}]
  %s5 = sld [smem:[#allocation0]]
  $region30: #{tpu_custom_call.1} parent=0
    _
  %s7 = ssub.s32 1, %s5
  %s8 = scalar_select 0, %s7, %s5
  %v9 = vstv %s3
  %10 = vst [vmem:[#allocation2] sm:$0x1] %v9
  $region1: #{tpu_custom_call.1} parent=0
    #allocation3 [shape = 'u8[8192]{0}', space=vmem, size = 0x2000, scoped, tag = 'input window, operand 0, single buffered']
    #allocation4 [shape = 's32[1]{0}', space=sflag, size = 0x4, scoped, tag = 'scoped memory for tpu_custom_call.1']
    %11 = vsyncpa [#allocation4], 0
    // Predicated region
    $region2: #{tpu_custom_call.1} parent=1 // pred_check
      _
    $region3: #{tpu_custom_call.1} parent=1 // pred_check_branch
      %13 = sbr.rel (0) target = $region5
    $region4: #{tpu_custom_call.1} parent=1 // pred_region
      %s15 = ssub.s32 256, 256
      %16 = vsyncadd [#allocation4], %s15
      %s17 = sshll.u32 [#allocation3], 4
      %s18 = int_to_ptr.vmem [resolvable:$true] %s17
      %23 = dma.hbm_to_vmem [thread:$0]  %s0, 256, %s18, [#allocation4], 32, 32, 2
    $region5: #{tpu_custom_call.1} parent=1 // pred_fallthru
      _
    // Predicated region
    $region6: #{tpu_custom_call.1} parent=1 // pred_check
      _
    $region7: #{tpu_custom_call.1} parent=1 // pred_check_branch
      %25 = sbr.rel (0) target = $region9
    $region8: #{tpu_custom_call.1} parent=1 // pred_region
      _
    $region9: #{tpu_custom_call.1} parent=1 // pred_fallthru
      _
    // Predicated region
    $region10: #{tpu_custom_call.1} parent=1 // pred_check
      _
    $region11: #{tpu_custom_call.1} parent=1 // pred_check_branch
      %27 = sbr.rel (0) target = $region13
    $region12: #{tpu_custom_call.1} parent=1 // pred_region
      _
    $region13: #{tpu_custom_call.1} parent=1 // pred_fallthru
      _
    // Predicated region
    $region14: #{tpu_custom_call.1} parent=1 // pred_check
      _
    $region15: #{tpu_custom_call.1} parent=1 // pred_check_branch
      %29 = sbr.rel (0) target = $region17
    $region16: #{tpu_custom_call.1} parent=1 // pred_region
      _
    $region17: #{tpu_custom_call.1} parent=1 // pred_fallthru
      _
    // Predicated region
    $region18: #{tpu_custom_call.1} parent=1 // pred_check
      _
    $region19: #{tpu_custom_call.1} parent=1 // pred_check_branch
      %31 = sbr.rel (0) target = $region21
    $region20: #{tpu_custom_call.1} parent=1 // pred_region
      %32 = dma.done [#allocation4], 256
    $region21: #{tpu_custom_call.1} parent=1 // pred_fallthru
      _
    %v33 = vld [vmem:[%s1] sm:$0xff]
    %v34 = vld [vmem:[%s1 + $0x8] sm:$0xff]
    %v35 = vld [vmem:[%s1 + $0x10] sm:$0xff]
    %v36 = vld [vmem:[%s1 + $0x18] sm:$0xff]
    %v37 = vld [vmem:[#allocation3] sm:$0x3]
    %vm38 = vcmask 261120
    %v40 = vsel %vm38, 0.0, 0
    %42 = vmatprep.subr.mxu0 0.0
    %43 = vmatpush1.msra.mxu0 0.0
    %44 = vmatprep.subr.mxu0 0.0
    %45 = vmatpush1.msra.mxu0 0.0
    %46 = vmatprep.subr.mxu0 0.0
    %47 = vmatpush1.msra.mxu0 0.0
    %48 = vmatprep.subr.mxu0 0.0
    %49 = vmatpush1.msra.mxu0 0.0
    %50 = vmatprep.subr.mxu0 0.0
    %51 = vmatpush1.msra.mxu0 0.0
    %52 = vmatprep.subr.mxu0 0.0
    %53 = vmatpush1.msra.mxu0 0.0
    %54 = vmatprep.subr.mxu0 0.0
    %55 = vmatpush1.msra.mxu0 0.0
    %56 = vmatprep.subr.mxu0 0.0
    %57 = vmatpush1.msra.mxu0 0.0
    %58 = vmatprep.subr.mxu0 0.0
    %59 = vmatpush1.msra.mxu0 0.0
    %60 = vmatprep.subr.mxu0 0.0
    %61 = vmatpush1.msra.mxu0 0.0
    %62 = vmatprep.subr.mxu0 0.0
    %63 = vmatpush1.msra.mxu0 0.0
    %64 = vmatprep.subr.mxu0 0.0
    %65 = vmatpush1.msra.mxu0 0.0
    %66 = vmatprep.subr.mxu0 0.0
    %67 = vmatpush1.msra.mxu0 %v36
    %68 = vmatprep.subr.mxu0 0.0
    %69 = vmatpush1.msra.mxu0 %v35
    %70 = vmatprep.subr.mxu0 0.0
    %71 = vmatpush1.msra.mxu0 %v34
    %72 = vmatprep.subr.mxu0 0.0
    %73 = vmatpush1.msra.mxu0 %v33
    %74 = vmatprep.subr.mxu0 0.0
    %75 = vmatpush2.msra.mxu0 0.0
    %76 = vmatprep.subr.mxu0 0.0
    %77 = vmatpush2.msra.mxu0 0.0
    %78 = vmatprep.subr.mxu0 0.0
    %79 = vmatpush2.msra.mxu0 0.0
    %80 = vmatprep.subr.mxu0 0.0
    %81 = vmatpush2.msra.mxu0 0.0
    %82 = vmatprep.subr.mxu0 0.0
    %83 = vmatpush2.msra.mxu0 0.0
    %84 = vmatprep.subr.mxu0 0.0
    %85 = vmatpush2.msra.mxu0 0.0
    %86 = vmatprep.subr.mxu0 0.0
    %87 = vmatpush2.msra.mxu0 0.0
    %88 = vmatprep.subr.mxu0 0.0
    %89 = vmatpush2.msra.mxu0 0.0
    %90 = vmatprep.subr.mxu0 0.0
    %91 = vmatpush2.msra.mxu0 0.0
    %92 = vmatprep.subr.mxu0 0.0
    %93 = vmatpush2.msra.mxu0 0.0
    %94 = vmatprep.subr.mxu0 0.0
    %95 = vmatpush2.msra.mxu0 0.0
    %96 = vmatprep.subr.mxu0 0.0
    %97 = vmatpush2.msra.mxu0 0.0
    %98 = vmatprep.subr.mxu0 0.0
    %99 = vmatpush2.msra.mxu0 0.0
    %100 = vmatprep.subr.mxu0 0.0
    %101 = vmatpush2.msra.mxu0 0.0
    %102 = vmatprep.subr.mxu0 0.0
    %103 = vmatpush2.msra.mxu0 0.0
    %104 = vmatprep.subr.mxu0 0.0
    %105 = vmatpush2.msra.mxu0 0.0
    %106 = vmatprep.mubr.f32.mxu0 0.0
    %107 = vmatmul.mubr.f32.gmra.mxu0 %v40
    %v108 = vpop.f32.mrf.mxu0
    %v109 = vadd.f32 0.0, %v108
    %v110 = vpop.f32.mrf.mxu0
    %111 = vdwg.mxu0
    %v112 = vadd.f32 %v37, %v109
    %v113 = vxor.u32 %v112, 2147483648
    %v114 = vmul.f32 %v113, 1.442695
    %v115 = vpow.pop %v114
    %v116 = vadd.f32 %v115, 1.0
    %v117 = vrcp.pop %v116
    %v118 = vmul.f32 1.0, %v117
    %v119 = vtanh.pop %v112
    %v120 = vmul.f32 %v118, 0.0
    %122 = vrot.lane.b32.xlu0 %v119, 64
    %v123 = vpop.permute.xlu0 %122
    %v125 = vmul.f32 %v118, %v123
    %127 = vrot.lane.b32.xlu0 %v125, 32
    %v128 = vpop.permute.xlu0 %127
    %v130 = vadd.f32 %v120, %v128
    %v131 = vtanh.pop %v130
    %133 = vrot.lane.b32.xlu0 %v131, 64
    %v134 = vpop.permute.xlu0 %133
    %v136 = vmul.f32 %v118, %v134
    %s137 = scalar_lea.vmem [#allocation3], 2
    %v138 = vld [vmem:[%s137] sm:$0x3]
    %140 = vrot.lane.b32.xlu0 %v136, 32
    %v141 = vpop.permute.xlu0 %140
    %v142 = vsel %vm38, %v141, 0
    %144 = vmatprep.subr.mxu0 0.0
    %145 = vmatpush1.msra.mxu0 0.0
    %146 = vmatprep.subr.mxu0 0.0
    %147 = vmatpush1.msra.mxu0 0.0
    %148 = vmatprep.subr.mxu0 0.0
    %149 = vmatpush1.msra.mxu0 0.0
    %150 = vmatprep.subr.mxu0 0.0
    %151 = vmatpush1.msra.mxu0 0.0
    %152 = vmatprep.subr.mxu0 0.0
    %153 = vmatpush1.msra.mxu0 0.0
    %154 = vmatprep.subr.mxu0 0.0
    %155 = vmatpush1.msra.mxu0 0.0
    %156 = vmatprep.subr.mxu0 0.0
    %157 = vmatpush1.msra.mxu0 0.0
    %158 = vmatprep.subr.mxu0 0.0
    %159 = vmatpush1.msra.mxu0 0.0
    %160 = vmatprep.subr.mxu0 0.0
    %161 = vmatpush1.msra.mxu0 0.0
    %162 = vmatprep.subr.mxu0 0.0
    %163 = vmatpush1.msra.mxu0 0.0
    %164 = vmatprep.subr.mxu0 0.0
    %165 = vmatpush1.msra.mxu0 0.0
    %166 = vmatprep.subr.mxu0 0.0
    %167 = vmatpush1.msra.mxu0 0.0
    %168 = vmatprep.subr.mxu0 0.0
    %169 = vmatpush1.msra.mxu0 %v36
    %170 = vmatprep.subr.mxu0 0.0
    %171 = vmatpush1.msra.mxu0 %v35
    %172 = vmatprep.subr.mxu0 0.0
    %173 = vmatpush1.msra.mxu0 %v34
    %174 = vmatprep.subr.mxu0 0.0
    %175 = vmatpush1.msra.mxu0 %v33
    %176 = vmatprep.subr.mxu0 0.0
    %177 = vmatpush2.msra.mxu0 0.0
    %178 = vmatprep.subr.mxu0 0.0
    %179 = vmatpush2.msra.mxu0 0.0
    %180 = vmatprep.subr.mxu0 0.0
    %181 = vmatpush2.msra.mxu0 0.0
    %182 = vmatprep.subr.mxu0 0.0
    %183 = vmatpush2.msra.mxu0 0.0
    %184 = vmatprep.subr.mxu0 0.0
    %185 = vmatpush2.msra.mxu0 0.0
    %186 = vmatprep.subr.mxu0 0.0
    %187 = vmatpush2.msra.mxu0 0.0
    %188 = vmatprep.subr.mxu0 0.0
    %189 = vmatpush2.msra.mxu0 0.0
    %190 = vmatprep.subr.mxu0 0.0
    %191 = vmatpush2.msra.mxu0 0.0
    %192 = vmatprep.subr.mxu0 0.0
    %193 = vmatpush2.msra.mxu0 0.0
    %194 = vmatprep.subr.mxu0 0.0
    %195 = vmatpush2.msra.mxu0 0.0
    %196 = vmatprep.subr.mxu0 0.0
    %197 = vmatpush2.msra.mxu0 0.0
    %198 = vmatprep.subr.mxu0 0.0
    %199 = vmatpush2.msra.mxu0 0.0
    %200 = vmatprep.subr.mxu0 0.0
    %201 = vmatpush2.msra.mxu0 0.0
    %202 = vmatprep.subr.mxu0 0.0
    %203 = vmatpush2.msra.mxu0 0.0
    %204 = vmatprep.subr.mxu0 0.0
    %205 = vmatpush2.msra.mxu0 0.0
    %206 = vmatprep.subr.mxu0 0.0
    %207 = vmatpush2.msra.mxu0 0.0
    %208 = vmatprep.mubr.f32.mxu0 0.0
    %209 = vmatmul.mubr.f32.gmra.mxu0 %v142
    %v210 = vpop.f32.mrf.mxu0
    %v211 = vadd.f32 0.0, %v210
    %v212 = vpop.f32.mrf.mxu0
    %213 = vdwg.mxu0
    %v214 = vadd.f32 %v138, %v211
    %v215 = vxor.u32 %v214, 2147483648
    %v216 = vmul.f32 %v215, 1.442695
    %v217 = vpow.pop %v216
    %v218 = vadd.f32 %v217, 1.0
    %v219 = vrcp.pop %v218
    %v220 = vmul.f32 1.0, %v219
    %v221 = vtanh.pop %v214
    %v222 = vmul.f32 %v220, %v130
    %224 = vrot.lane.b32.xlu0 %v221, 64
    %v225 = vpop.permute.xlu0 %224
    %v227 = vmul.f32 %v220, %v225
    %229 = vrot.lane.b32.xlu0 %v227, 32
    %v230 = vpop.permute.xlu0 %229
    %v232 = vadd.f32 %v222, %v230
    %v233 = vtanh.pop %v232
    %235 = vrot.lane.b32.xlu0 %v233, 64
    %v236 = vpop.permute.xlu0 %235
    %v238 = vmul.f32 %v220, %v236
    %s239 = scalar_lea.vmem [#allocation3], 4
    %v240 = vld [vmem:[%s239] sm:$0x3]
    %242 = vrot.lane.b32.xlu0 %v238, 32
    %v243 = vpop.permute.xlu0 %242
    %v244 = vsel %vm38, %v243, 0
    %246 = vmatprep.subr.mxu0 0.0
    %247 = vmatpush1.msra.mxu0 0.0
    %248 = vmatprep.subr.mxu0 0.0
    %249 = vmatpush1.msra.mxu0 0.0
    %250 = vmatprep.subr.mxu0 0.0
    %251 = vmatpush1.msra.mxu0 0.0
    %252 = vmatprep.subr.mxu0 0.0
    %253 = vmatpush1.msra.mxu0 0.0
    %254 = vmatprep.subr.mxu0 0.0
    %255 = vmatpush1.msra.mxu0 0.0
    %256 = vmatprep.subr.mxu0 0.0
    %257 = vmatpush1.msra.mxu0 0.0
    %258 = vmatprep.subr.mxu0 0.0
    %259 = vmatpush1.msra.mxu0 0.0
    %260 = vmatprep.subr.mxu0 0.0
    %261 = vmatpush1.msra.mxu0 0.0
    %262 = vmatprep.subr.mxu0 0.0
    %263 = vmatpush1.msra.mxu0 0.0
    %264 = vmatprep.subr.mxu0 0.0
    %265 = vmatpush1.msra.mxu0 0.0
    %266 = vmatprep.subr.mxu0 0.0
    %267 = vmatpush1.msra.mxu0 0.0
    %268 = vmatprep.subr.mxu0 0.0
    %269 = vmatpush1.msra.mxu0 0.0
    %270 = vmatprep.subr.mxu0 0.0
    %271 = vmatpush1.msra.mxu0 %v36
    %272 = vmatprep.subr.mxu0 0.0
    %273 = vmatpush1.msra.mxu0 %v35
    %274 = vmatprep.subr.mxu0 0.0
    %275 = vmatpush1.msra.mxu0 %v34
    %276 = vmatprep.subr.mxu0 0.0
    %277 = vmatpush1.msra.mxu0 %v33
    %278 = vmatprep.subr.mxu0 0.0
    %279 = vmatpush2.msra.mxu0 0.0
    %280 = vmatprep.subr.mxu0 0.0
    %281 = vmatpush2.msra.mxu0 0.0
    %282 = vmatprep.subr.mxu0 0.0
    %283 = vmatpush2.msra.mxu0 0.0
    %284 = vmatprep.subr.mxu0 0.0
    %285 = vmatpush2.msra.mxu0 0.0
    %286 = vmatprep.subr.mxu0 0.0
    %287 = vmatpush2.msra.mxu0 0.0
    %288 = vmatprep.subr.mxu0 0.0
    %289 = vmatpush2.msra.mxu0 0.0
    %290 = vmatprep.subr.mxu0 0.0
    %291 = vmatpush2.msra.mxu0 0.0
    %292 = vmatprep.subr.mxu0 0.0
    %293 = vmatpush2.msra.mxu0 0.0
    %294 = vmatprep.subr.mxu0 0.0
    %295 = vmatpush2.msra.mxu0 0.0
    %296 = vmatprep.subr.mxu0 0.0
    %297 = vmatpush2.msra.mxu0 0.0
    %298 = vmatprep.subr.mxu0 0.0
    %299 = vmatpush2.msra.mxu0 0.0
    %300 = vmatprep.subr.mxu0 0.0
    %301 = vmatpush2.msra.mxu0 0.0
    %302 = vmatprep.subr.mxu0 0.0
    %303 = vmatpush2.msra.mxu0 0.0
    %304 = vmatprep.subr.mxu0 0.0
    %305 = vmatpush2.msra.mxu0 0.0
    %306 = vmatprep.subr.mxu0 0.0
    %307 = vmatpush2.msra.mxu0 0.0
    %308 = vmatprep.subr.mxu0 0.0
    %309 = vmatpush2.msra.mxu0 0.0
    %310 = vmatprep.mubr.f32.mxu0 0.0
    %311 = vmatmul.mubr.f32.gmra.mxu0 %v244
    %v312 = vpop.f32.mrf.mxu0
    %v313 = vadd.f32 0.0, %v312
    %v314 = vpop.f32.mrf.mxu0
    %315 = vdwg.mxu0
    %v316 = vadd.f32 %v240, %v313
    %v317 = vxor.u32 %v316, 2147483648
    %v318 = vmul.f32 %v317, 1.442695
    %v319 = vpow.pop %v318
    %v320 = vadd.f32 %v319, 1.0
    %v321 = vrcp.pop %v320
    %v322 = vmul.f32 1.0, %v321
    %v323 = vtanh.pop %v316
    %v324 = vmul.f32 %v322, %v232
    %326 = vrot.lane.b32.xlu0 %v323, 64
    %v327 = vpop.permute.xlu0 %326
    %v329 = vmul.f32 %v322, %v327
    %331 = vrot.lane.b32.xlu0 %v329, 32
    %v332 = vpop.permute.xlu0 %331
    %v334 = vadd.f32 %v324, %v332
    %v335 = vtanh.pop %v334
    %337 = vrot.lane.b32.xlu0 %v335, 64
    %v338 = vpop.permute.xlu0 %337
    %v340 = vmul.f32 %v322, %v338
    %s341 = scalar_lea.vmem [#allocation3], 6
    %v342 = vld [vmem:[%s341] sm:$0x3]
    %344 = vrot.lane.b32.xlu0 %v340, 32
    %v345 = vpop.permute.xlu0 %344
    %v346 = vsel %vm38, %v345, 0
    %348 = vmatprep.subr.mxu0 0.0
    %349 = vmatpush1.msra.mxu0 0.0
    %350 = vmatprep.subr.mxu0 0.0
    %351 = vmatpush1.msra.mxu0 0.0
    %352 = vmatprep.subr.mxu0 0.0
    %353 = vmatpush1.msra.mxu0 0.0
    %354 = vmatprep.subr.mxu0 0.0
    %355 = vmatpush1.msra.mxu0 0.0
    %356 = vmatprep.subr.mxu0 0.0
    %357 = vmatpush1.msra.mxu0 0.0
    %358 = vmatprep.subr.mxu0 0.0
    %359 = vmatpush1.msra.mxu0 0.0
    %360 = vmatprep.subr.mxu0 0.0
    %361 = vmatpush1.msra.mxu0 0.0
    %362 = vmatprep.subr.mxu0 0.0
    %363 = vmatpush1.msra.mxu0 0.0
    %364 = vmatprep.subr.mxu0 0.0
    %365 = vmatpush1.msra.mxu0 0.0
    %366 = vmatprep.subr.mxu0 0.0
    %367 = vmatpush1.msra.mxu0 0.0
    %368 = vmatprep.subr.mxu0 0.0
    %369 = vmatpush1.msra.mxu0 0.0
    %370 = vmatprep.subr.mxu0 0.0
    %371 = vmatpush1.msra.mxu0 0.0
    %372 = vmatprep.subr.mxu0 0.0
    %373 = vmatpush1.msra.mxu0 %v36
    %374 = vmatprep.subr.mxu0 0.0
    %375 = vmatpush1.msra.mxu0 %v35
    %376 = vmatprep.subr.mxu0 0.0
    %377 = vmatpush1.msra.mxu0 %v34
    %378 = vmatprep.subr.mxu0 0.0
    %379 = vmatpush1.msra.mxu0 %v33
    %380 = vmatprep.subr.mxu0 0.0
    %381 = vmatpush2.msra.mxu0 0.0
    %382 = vmatprep.subr.mxu0 0.0
    %383 = vmatpush2.msra.mxu0 0.0
    %384 = vmatprep.subr.mxu0 0.0
    %385 = vmatpush2.msra.mxu0 0.0
    %386 = vmatprep.subr.mxu0 0.0
    %387 = vmatpush2.msra.mxu0 0.0
    %388 = vmatprep.subr.mxu0 0.0
    %389 = vmatpush2.msra.mxu0 0.0
    %390 = vmatprep.subr.mxu0 0.0
    %391 = vmatpush2.msra.mxu0 0.0
    %392 = vmatprep.subr.mxu0 0.0
    %393 = vmatpush2.msra.mxu0 0.0
    %394 = vmatprep.subr.mxu0 0.0
    %395 = vmatpush2.msra.mxu0 0.0
    %396 = vmatprep.subr.mxu0 0.0
    %397 = vmatpush2.msra.mxu0 0.0
    %398 = vmatprep.subr.mxu0 0.0
    %399 = vmatpush2.msra.mxu0 0.0
    %400 = vmatprep.subr.mxu0 0.0
    %401 = vmatpush2.msra.mxu0 0.0
    %402 = vmatprep.subr.mxu0 0.0
    %403 = vmatpush2.msra.mxu0 0.0
    %404 = vmatprep.subr.mxu0 0.0
    %405 = vmatpush2.msra.mxu0 0.0
    %406 = vmatprep.subr.mxu0 0.0
    %407 = vmatpush2.msra.mxu0 0.0
    %408 = vmatprep.subr.mxu0 0.0
    %409 = vmatpush2.msra.mxu0 0.0
    %410 = vmatprep.subr.mxu0 0.0
    %411 = vmatpush2.msra.mxu0 0.0
    %412 = vmatprep.mubr.f32.mxu0 0.0
    %413 = vmatmul.mubr.f32.gmra.mxu0 %v346
    %v414 = vpop.f32.mrf.mxu0
    %v415 = vadd.f32 0.0, %v414
    %v416 = vpop.f32.mrf.mxu0
    %417 = vdwg.mxu0
    %v418 = vadd.f32 %v342, %v415
    %v419 = vxor.u32 %v418, 2147483648
    %v420 = vmul.f32 %v419, 1.442695
    %v421 = vpow.pop %v420
    %v422 = vadd.f32 %v421, 1.0
    %v423 = vrcp.pop %v422
    %v424 = vmul.f32 1.0, %v423
    %v425 = vtanh.pop %v418
    %v426 = vmul.f32 %v424, %v334
    %428 = vrot.lane.b32.xlu0 %v425, 64
    %v429 = vpop.permute.xlu0 %428
    %v431 = vmul.f32 %v424, %v429
    %433 = vrot.lane.b32.xlu0 %v431, 32
    %v434 = vpop.permute.xlu0 %433
    %v436 = vadd.f32 %v426, %v434
    %v437 = vtanh.pop %v436
    %439 = vrot.lane.b32.xlu0 %v437, 64
    %v440 = vpop.permute.xlu0 %439
    %v442 = vmul.f32 %v424, %v440
    %s443 = scalar_lea.vmem [#allocation3], 8
    %v444 = vld [vmem:[%s443] sm:$0x3]
    %446 = vrot.lane.b32.xlu0 %v442, 32
    %v447 = vpop.permute.xlu0 %446
    %v448 = vsel %vm38, %v447, 0
    %450 = vmatprep.subr.mxu0 0.0
    %451 = vmatpush1.msra.mxu0 0.0
    %452 = vmatprep.subr.mxu0 0.0
    %453 = vmatpush1.msra.mxu0 0.0
    %454 = vmatprep.subr.mxu0 0.0
    %455 = vmatpush1.msra.mxu0 0.0
    %456 = vmatprep.subr.mxu0 0.0
    %457 = vmatpush1.msra.mxu0 0.0
    %458 = vmatprep.subr.mxu0 0.0
    %459 = vmatpush1.msra.mxu0 0.0
    %460 = vmatprep.subr.mxu0 0.0
    %461 = vmatpush1.msra.mxu0 0.0
    %462 = vmatprep.subr.mxu0 0.0
    %463 = vmatpush1.msra.mxu0 0.0
    %464 = vmatprep.subr.mxu0 0.0
    %465 = vmatpush1.msra.mxu0 0.0
    %466 = vmatprep.subr.mxu0 0.0
    %467 = vmatpush1.msra.mxu0 0.0
    %468 = vmatprep.subr.mxu0 0.0
    %469 = vmatpush1.msra.mxu0 0.0
    %470 = vmatprep.subr.mxu0 0.0
    %471 = vmatpush1.msra.mxu0 0.0
    %472 = vmatprep.subr.mxu0 0.0
    %473 = vmatpush1.msra.mxu0 0.0
    %474 = vmatprep.subr.mxu0 0.0
    %475 = vmatpush1.msra.mxu0 %v36
    %476 = vmatprep.subr.mxu0 0.0
    %477 = vmatpush1.msra.mxu0 %v35
    %478 = vmatprep.subr.mxu0 0.0
    %479 = vmatpush1.msra.mxu0 %v34
    %480 = vmatprep.subr.mxu0 0.0
    %481 = vmatpush1.msra.mxu0 %v33
    %482 = vmatprep.subr.mxu0 0.0
    %483 = vmatpush2.msra.mxu0 0.0
    %484 = vmatprep.subr.mxu0 0.0
    %485 = vmatpush2.msra.mxu0 0.0
    %486 = vmatprep.subr.mxu0 0.0
    %487 = vmatpush2.msra.mxu0 0.0
    %488 = vmatprep.subr.mxu0 0.0
    %489 = vmatpush2.msra.mxu0 0.0
    %490 = vmatprep.subr.mxu0 0.0
    %491 = vmatpush2.msra.mxu0 0.0
    %492 = vmatprep.subr.mxu0 0.0
    %493 = vmatpush2.msra.mxu0 0.0
    %494 = vmatprep.subr.mxu0 0.0
    %495 = vmatpush2.msra.mxu0 0.0
    %496 = vmatprep.subr.mxu0 0.0
    %497 = vmatpush2.msra.mxu0 0.0
    %498 = vmatprep.subr.mxu0 0.0
    %499 = vmatpush2.msra.mxu0 0.0
    %500 = vmatprep.subr.mxu0 0.0
    %501 = vmatpush2.msra.mxu0 0.0
    %502 = vmatprep.subr.mxu0 0.0
    %503 = vmatpush2.msra.mxu0 0.0
    %504 = vmatprep.subr.mxu0 0.0
    %505 = vmatpush2.msra.mxu0 0.0
    %506 = vmatprep.subr.mxu0 0.0
    %507 = vmatpush2.msra.mxu0 0.0
    %508 = vmatprep.subr.mxu0 0.0
    %509 = vmatpush2.msra.mxu0 0.0
    %510 = vmatprep.subr.mxu0 0.0
    %511 = vmatpush2.msra.mxu0 0.0
    %512 = vmatprep.subr.mxu0 0.0
    %513 = vmatpush2.msra.mxu0 0.0
    %514 = vmatprep.mubr.f32.mxu0 0.0
    %515 = vmatmul.mubr.f32.gmra.mxu0 %v448
    %v516 = vpop.f32.mrf.mxu0
    %v517 = vadd.f32 0.0, %v516
    %v518 = vpop.f32.mrf.mxu0
    %519 = vdwg.mxu0
    %v520 = vadd.f32 %v444, %v517
    %v521 = vxor.u32 %v520, 2147483648
    %v522 = vmul.f32 %v521, 1.442695
    %v523 = vpow.pop %v522
    %v524 = vadd.f32 %v523, 1.0
    %v525 = vrcp.pop %v524
    %v526 = vmul.f32 1.0, %v525
    %v527 = vtanh.pop %v520
    %v528 = vmul.f32 %v526, %v436
    %530 = vrot.lane.b32.xlu0 %v527, 64
    %v531 = vpop.permute.xlu0 %530
    %v533 = vmul.f32 %v526, %v531
    %535 = vrot.lane.b32.xlu0 %v533, 32
    %v536 = vpop.permute.xlu0 %535
    %v538 = vadd.f32 %v528, %v536
    %v539 = vtanh.pop %v538
    %541 = vrot.lane.b32.xlu0 %v539, 64
    %v542 = vpop.permute.xlu0 %541
    %v544 = vmul.f32 %v526, %v542
    %s545 = scalar_lea.vmem [#allocation3], 10
    %v546 = vld [vmem:[%s545] sm:$0x3]
    %548 = vrot.lane.b32.xlu0 %v544, 32
    %v549 = vpop.permute.xlu0 %548
    %v550 = vsel %vm38, %v549, 0
    %552 = vmatprep.subr.mxu0 0.0
    %553 = vmatpush1.msra.mxu0 0.0
    %554 = vmatprep.subr.mxu0 0.0
    %555 = vmatpush1.msra.mxu0 0.0
    %556 = vmatprep.subr.mxu0 0.0
    %557 = vmatpush1.msra.mxu0 0.0
    %558 = vmatprep.subr.mxu0 0.0
    %559 = vmatpush1.msra.mxu0 0.0
    %560 = vmatprep.subr.mxu0 0.0
    %561 = vmatpush1.msra.mxu0 0.0
    %562 = vmatprep.subr.mxu0 0.0
    %563 = vmatpush1.msra.mxu0 0.0
    %564 = vmatprep.subr.mxu0 0.0
    %565 = vmatpush1.msra.mxu0 0.0
    %566 = vmatprep.subr.mxu0 0.0
    %567 = vmatpush1.msra.mxu0 0.0
    %568 = vmatprep.subr.mxu0 0.0
    %569 = vmatpush1.msra.mxu0 0.0
    %570 = vmatprep.subr.mxu0 0.0
    %571 = vmatpush1.msra.mxu0 0.0
    %572 = vmatprep.subr.mxu0 0.0
    %573 = vmatpush1.msra.mxu0 0.0
    %574 = vmatprep.subr.mxu0 0.0
    %575 = vmatpush1.msra.mxu0 0.0
    %576 = vmatprep.subr.mxu0 0.0
    %577 = vmatpush1.msra.mxu0 %v36
    %578 = vmatprep.subr.mxu0 0.0
    %579 = vmatpush1.msra.mxu0 %v35
    %580 = vmatprep.subr.mxu0 0.0
    %581 = vmatpush1.msra.mxu0 %v34
    %582 = vmatprep.subr.mxu0 0.0
    %583 = vmatpush1.msra.mxu0 %v33
    %584 = vmatprep.subr.mxu0 0.0
    %585 = vmatpush2.msra.mxu0 0.0
    %586 = vmatprep.subr.mxu0 0.0
    %587 = vmatpush2.msra.mxu0 0.0
    %588 = vmatprep.subr.mxu0 0.0
    %589 = vmatpush2.msra.mxu0 0.0
    %590 = vmatprep.subr.mxu0 0.0
    %591 = vmatpush2.msra.mxu0 0.0
    %592 = vmatprep.subr.mxu0 0.0
    %593 = vmatpush2.msra.mxu0 0.0
    %594 = vmatprep.subr.mxu0 0.0
    %595 = vmatpush2.msra.mxu0 0.0
    %596 = vmatprep.subr.mxu0 0.0
    %597 = vmatpush2.msra.mxu0 0.0
    %598 = vmatprep.subr.mxu0 0.0
    %599 = vmatpush2.msra.mxu0 0.0
    %600 = vmatprep.subr.mxu0 0.0
    %601 = vmatpush2.msra.mxu0 0.0
    %602 = vmatprep.subr.mxu0 0.0
    %603 = vmatpush2.msra.mxu0 0.0
    %604 = vmatprep.subr.mxu0 0.0
    %605 = vmatpush2.msra.mxu0 0.0
    %606 = vmatprep.subr.mxu0 0.0
    %607 = vmatpush2.msra.mxu0 0.0
    %608 = vmatprep.subr.mxu0 0.0
    %609 = vmatpush2.msra.mxu0 0.0
    %610 = vmatprep.subr.mxu0 0.0
    %611 = vmatpush2.msra.mxu0 0.0
    %612 = vmatprep.subr.mxu0 0.0
    %613 = vmatpush2.msra.mxu0 0.0
    %614 = vmatprep.subr.mxu0 0.0
    %615 = vmatpush2.msra.mxu0 0.0
    %616 = vmatprep.mubr.f32.mxu0 0.0
    %617 = vmatmul.mubr.f32.gmra.mxu0 %v550
    %v618 = vpop.f32.mrf.mxu0
    %v619 = vadd.f32 0.0, %v618
    %v620 = vpop.f32.mrf.mxu0
    %621 = vdwg.mxu0
    %v622 = vadd.f32 %v546, %v619
    %v623 = vxor.u32 %v622, 2147483648
    %v624 = vmul.f32 %v623, 1.442695
    %v625 = vpow.pop %v624
    %v626 = vadd.f32 %v625, 1.0
    %v627 = vrcp.pop %v626
    %v628 = vmul.f32 1.0, %v627
    %v629 = vtanh.pop %v622
    %v630 = vmul.f32 %v628, %v538
    %632 = vrot.lane.b32.xlu0 %v629, 64
    %v633 = vpop.permute.xlu0 %632
    %v635 = vmul.f32 %v628, %v633
    %637 = vrot.lane.b32.xlu0 %v635, 32
    %v638 = vpop.permute.xlu0 %637
    %v640 = vadd.f32 %v630, %v638
    %v641 = vtanh.pop %v640
    %643 = vrot.lane.b32.xlu0 %v641, 64
    %v644 = vpop.permute.xlu0 %643
    %v646 = vmul.f32 %v628, %v644
    %s647 = scalar_lea.vmem [#allocation3], 12
    %v648 = vld [vmem:[%s647] sm:$0x3]
    %650 = vrot.lane.b32.xlu0 %v646, 32
    %v651 = vpop.permute.xlu0 %650
    %v652 = vsel %vm38, %v651, 0
    %654 = vmatprep.subr.mxu0 0.0
    %655 = vmatpush1.msra.mxu0 0.0
    %656 = vmatprep.subr.mxu0 0.0
    %657 = vmatpush1.msra.mxu0 0.0
    %658 = vmatprep.subr.mxu0 0.0
    %659 = vmatpush1.msra.mxu0 0.0
    %660 = vmatprep.subr.mxu0 0.0
    %661 = vmatpush1.msra.mxu0 0.0
    %662 = vmatprep.subr.mxu0 0.0
    %663 = vmatpush1.msra.mxu0 0.0
    %664 = vmatprep.subr.mxu0 0.0
    %665 = vmatpush1.msra.mxu0 0.0
    %666 = vmatprep.subr.mxu0 0.0
    %667 = vmatpush1.msra.mxu0 0.0
    %668 = vmatprep.subr.mxu0 0.0
    %669 = vmatpush1.msra.mxu0 0.0
    %670 = vmatprep.subr.mxu0 0.0
    %671 = vmatpush1.msra.mxu0 0.0
    %672 = vmatprep.subr.mxu0 0.0
    %673 = vmatpush1.msra.mxu0 0.0
    %674 = vmatprep.subr.mxu0 0.0
    %675 = vmatpush1.msra.mxu0 0.0
    %676 = vmatprep.subr.mxu0 0.0
    %677 = vmatpush1.msra.mxu0 0.0
    %678 = vmatprep.subr.mxu0 0.0
    %679 = vmatpush1.msra.mxu0 %v36
    %680 = vmatprep.subr.mxu0 0.0
    %681 = vmatpush1.msra.mxu0 %v35
    %682 = vmatprep.subr.mxu0 0.0
    %683 = vmatpush1.msra.mxu0 %v34
    %684 = vmatprep.subr.mxu0 0.0
    %685 = vmatpush1.msra.mxu0 %v33
    %686 = vmatprep.subr.mxu0 0.0
    %687 = vmatpush2.msra.mxu0 0.0
    %688 = vmatprep.subr.mxu0 0.0
    %689 = vmatpush2.msra.mxu0 0.0
    %690 = vmatprep.subr.mxu0 0.0
    %691 = vmatpush2.msra.mxu0 0.0
    %692 = vmatprep.subr.mxu0 0.0
    %693 = vmatpush2.msra.mxu0 0.0
    %694 = vmatprep.subr.mxu0 0.0
    %695 = vmatpush2.msra.mxu0 0.0
    %696 = vmatprep.subr.mxu0 0.0
    %697 = vmatpush2.msra.mxu0 0.0
    %698 = vmatprep.subr.mxu0 0.0
    %699 = vmatpush2.msra.mxu0 0.0
    %700 = vmatprep.subr.mxu0 0.0
    %701 = vmatpush2.msra.mxu0 0.0
    %702 = vmatprep.subr.mxu0 0.0
    %703 = vmatpush2.msra.mxu0 0.0
    %704 = vmatprep.subr.mxu0 0.0
    %705 = vmatpush2.msra.mxu0 0.0
    %706 = vmatprep.subr.mxu0 0.0
    %707 = vmatpush2.msra.mxu0 0.0
    %708 = vmatprep.subr.mxu0 0.0
    %709 = vmatpush2.msra.mxu0 0.0
    %710 = vmatprep.subr.mxu0 0.0
    %711 = vmatpush2.msra.mxu0 0.0
    %712 = vmatprep.subr.mxu0 0.0
    %713 = vmatpush2.msra.mxu0 0.0
    %714 = vmatprep.subr.mxu0 0.0
    %715 = vmatpush2.msra.mxu0 0.0
    %716 = vmatprep.subr.mxu0 0.0
    %717 = vmatpush2.msra.mxu0 0.0
    %718 = vmatprep.mubr.f32.mxu0 0.0
    %719 = vmatmul.mubr.f32.gmra.mxu0 %v652
    %v720 = vpop.f32.mrf.mxu0
    %v721 = vadd.f32 0.0, %v720
    %v722 = vpop.f32.mrf.mxu0
    %723 = vdwg.mxu0
    %v724 = vadd.f32 %v648, %v721
    %v725 = vxor.u32 %v724, 2147483648
    %v726 = vmul.f32 %v725, 1.442695
    %v727 = vpow.pop %v726
    %v728 = vadd.f32 %v727, 1.0
    %v729 = vrcp.pop %v728
    %v730 = vmul.f32 1.0, %v729
    %v731 = vtanh.pop %v724
    %v732 = vmul.f32 %v730, %v640
    %734 = vrot.lane.b32.xlu0 %v731, 64
    %v735 = vpop.permute.xlu0 %734
    %v737 = vmul.f32 %v730, %v735
    %739 = vrot.lane.b32.xlu0 %v737, 32
    %v740 = vpop.permute.xlu0 %739
    %v742 = vadd.f32 %v732, %v740
    %v743 = vtanh.pop %v742
    %745 = vrot.lane.b32.xlu0 %v743, 64
    %v746 = vpop.permute.xlu0 %745
    %v748 = vmul.f32 %v730, %v746
    %s749 = scalar_lea.vmem [#allocation3], 14
    %v750 = vld [vmem:[%s749] sm:$0x3]
    %752 = vrot.lane.b32.xlu0 %v748, 32
    %v753 = vpop.permute.xlu0 %752
    %v754 = vsel %vm38, %v753, 0
    %756 = vmatprep.subr.mxu0 0.0
    %757 = vmatpush1.msra.mxu0 0.0
    %758 = vmatprep.subr.mxu0 0.0
    %759 = vmatpush1.msra.mxu0 0.0
    %760 = vmatprep.subr.mxu0 0.0
    %761 = vmatpush1.msra.mxu0 0.0
    %762 = vmatprep.subr.mxu0 0.0
    %763 = vmatpush1.msra.mxu0 0.0
    %764 = vmatprep.subr.mxu0 0.0
    %765 = vmatpush1.msra.mxu0 0.0
    %766 = vmatprep.subr.mxu0 0.0
    %767 = vmatpush1.msra.mxu0 0.0
    %768 = vmatprep.subr.mxu0 0.0
    %769 = vmatpush1.msra.mxu0 0.0
    %770 = vmatprep.subr.mxu0 0.0
    %771 = vmatpush1.msra.mxu0 0.0
    %772 = vmatprep.subr.mxu0 0.0
    %773 = vmatpush1.msra.mxu0 0.0
    %774 = vmatprep.subr.mxu0 0.0
    %775 = vmatpush1.msra.mxu0 0.0
    %776 = vmatprep.subr.mxu0 0.0
    %777 = vmatpush1.msra.mxu0 0.0
    %778 = vmatprep.subr.mxu0 0.0
    %779 = vmatpush1.msra.mxu0 0.0
    %780 = vmatprep.subr.mxu0 0.0
    %781 = vmatpush1.msra.mxu0 %v36
    %782 = vmatprep.subr.mxu0 0.0
    %783 = vmatpush1.msra.mxu0 %v35
    %784 = vmatprep.subr.mxu0 0.0
    %785 = vmatpush1.msra.mxu0 %v34
    %786 = vmatprep.subr.mxu0 0.0
    %787 = vmatpush1.msra.mxu0 %v33
    %788 = vmatprep.subr.mxu0 0.0
    %789 = vmatpush2.msra.mxu0 0.0
    %790 = vmatprep.subr.mxu0 0.0
    %791 = vmatpush2.msra.mxu0 0.0
    %792 = vmatprep.subr.mxu0 0.0
    %793 = vmatpush2.msra.mxu0 0.0
    %794 = vmatprep.subr.mxu0 0.0
    %795 = vmatpush2.msra.mxu0 0.0
    %796 = vmatprep.subr.mxu0 0.0
    %797 = vmatpush2.msra.mxu0 0.0
    %798 = vmatprep.subr.mxu0 0.0
    %799 = vmatpush2.msra.mxu0 0.0
    %800 = vmatprep.subr.mxu0 0.0
    %801 = vmatpush2.msra.mxu0 0.0
    %802 = vmatprep.subr.mxu0 0.0
    %803 = vmatpush2.msra.mxu0 0.0
    %804 = vmatprep.subr.mxu0 0.0
    %805 = vmatpush2.msra.mxu0 0.0
    %806 = vmatprep.subr.mxu0 0.0
    %807 = vmatpush2.msra.mxu0 0.0
    %808 = vmatprep.subr.mxu0 0.0
    %809 = vmatpush2.msra.mxu0 0.0
    %810 = vmatprep.subr.mxu0 0.0
    %811 = vmatpush2.msra.mxu0 0.0
    %812 = vmatprep.subr.mxu0 0.0
    %813 = vmatpush2.msra.mxu0 0.0
    %814 = vmatprep.subr.mxu0 0.0
    %815 = vmatpush2.msra.mxu0 0.0
    %816 = vmatprep.subr.mxu0 0.0
    %817 = vmatpush2.msra.mxu0 0.0
    %818 = vmatprep.subr.mxu0 0.0
    %819 = vmatpush2.msra.mxu0 0.0
    %820 = vmatprep.mubr.f32.mxu0 0.0
    %821 = vmatmul.mubr.f32.gmra.mxu0 %v754
    %v822 = vpop.f32.mrf.mxu0
    %v823 = vadd.f32 0.0, %v822
    %v824 = vpop.f32.mrf.mxu0
    %825 = vdwg.mxu0
    %v826 = vadd.f32 %v750, %v823
    %v827 = vxor.u32 %v826, 2147483648
    %v828 = vmul.f32 %v827, 1.442695
    %v829 = vpow.pop %v828
    %v830 = vadd.f32 %v829, 1.0
    %v831 = vrcp.pop %v830
    %v832 = vmul.f32 1.0, %v831
    %v833 = vtanh.pop %v826
    %v834 = vmul.f32 %v832, %v742
    %836 = vrot.lane.b32.xlu0 %v833, 64
    %v837 = vpop.permute.xlu0 %836
    %v839 = vmul.f32 %v832, %v837
    %841 = vrot.lane.b32.xlu0 %v839, 32
    %v842 = vpop.permute.xlu0 %841
    %v844 = vadd.f32 %v834, %v842
    %v845 = vtanh.pop %v844
    %847 = vrot.lane.b32.xlu0 %v845, 64
    %v848 = vpop.permute.xlu0 %847
    %v850 = vmul.f32 %v832, %v848
    %v851 = vld [vmem:[%s2] sm:$0xff]
    %v852 = vld [vmem:[%s2 + $0x8] sm:$0xff]
    %v853 = vld [vmem:[%s2 + $0x10] sm:$0xff]
    %v854 = vld [vmem:[%s2 + $0x18] sm:$0xff]
    %v855 = vld [vmem:[#allocation2] sm:$0x1]
    %v857 = vlaneseq
    %v858 = vshrl.u32 %v857, 7
    %v859 = vsub.s32 0, %v858
    %v860 = vrot.slane %v855, %v859
    %863 = vrot.lane.b32.xlu0 %v850, 32
    %v864 = vpop.permute.xlu0 %863
    %v865 = vsel %vm38, %v864, 0
    %867 = vmatprep.subr.mxu0 0.0
    %868 = vmatpush1.msra.mxu0 0.0
    %869 = vmatprep.subr.mxu0 0.0
    %870 = vmatpush1.msra.mxu0 0.0
    %871 = vmatprep.subr.mxu0 0.0
    %872 = vmatpush1.msra.mxu0 0.0
    %873 = vmatprep.subr.mxu0 0.0
    %874 = vmatpush1.msra.mxu0 0.0
    %875 = vmatprep.subr.mxu0 0.0
    %876 = vmatpush1.msra.mxu0 0.0
    %877 = vmatprep.subr.mxu0 0.0
    %878 = vmatpush1.msra.mxu0 0.0
    %879 = vmatprep.subr.mxu0 0.0
    %880 = vmatpush1.msra.mxu0 0.0
    %881 = vmatprep.subr.mxu0 0.0
    %882 = vmatpush1.msra.mxu0 0.0
    %883 = vmatprep.subr.mxu0 0.0
    %884 = vmatpush1.msra.mxu0 0.0
    %885 = vmatprep.subr.mxu0 0.0
    %886 = vmatpush1.msra.mxu0 0.0
    %887 = vmatprep.subr.mxu0 0.0
    %888 = vmatpush1.msra.mxu0 0.0
    %889 = vmatprep.subr.mxu0 0.0
    %890 = vmatpush1.msra.mxu0 0.0
    %891 = vmatprep.subr.mxu0 0.0
    %892 = vmatpush1.msra.mxu0 %v854
    %893 = vmatprep.subr.mxu0 0.0
    %894 = vmatpush1.msra.mxu0 %v853
    %895 = vmatprep.subr.mxu0 0.0
    %896 = vmatpush1.msra.mxu0 %v852
    %897 = vmatprep.subr.mxu0 0.0
    %898 = vmatpush1.msra.mxu0 %v851
    %899 = vmatprep.subr.mxu0 0.0
    %900 = vmatpush2.msra.mxu0 0.0
    %901 = vmatprep.subr.mxu0 0.0
    %902 = vmatpush2.msra.mxu0 0.0
    %903 = vmatprep.subr.mxu0 0.0
    %904 = vmatpush2.msra.mxu0 0.0
    %905 = vmatprep.subr.mxu0 0.0
    %906 = vmatpush2.msra.mxu0 0.0
    %907 = vmatprep.subr.mxu0 0.0
    %908 = vmatpush2.msra.mxu0 0.0
    %909 = vmatprep.subr.mxu0 0.0
    %910 = vmatpush2.msra.mxu0 0.0
    %911 = vmatprep.subr.mxu0 0.0
    %912 = vmatpush2.msra.mxu0 0.0
    %913 = vmatprep.subr.mxu0 0.0
    %914 = vmatpush2.msra.mxu0 0.0
    %915 = vmatprep.subr.mxu0 0.0
    %916 = vmatpush2.msra.mxu0 0.0
    %917 = vmatprep.subr.mxu0 0.0
    %918 = vmatpush2.msra.mxu0 0.0
    %919 = vmatprep.subr.mxu0 0.0
    %920 = vmatpush2.msra.mxu0 0.0
    %921 = vmatprep.subr.mxu0 0.0
    %922 = vmatpush2.msra.mxu0 0.0
    %923 = vmatprep.subr.mxu0 0.0
    %924 = vmatpush2.msra.mxu0 0.0
    %925 = vmatprep.subr.mxu0 0.0
    %926 = vmatpush2.msra.mxu0 0.0
    %927 = vmatprep.subr.mxu0 0.0
    %928 = vmatpush2.msra.mxu0 0.0
    %929 = vmatprep.subr.mxu0 0.0
    %930 = vmatpush2.msra.mxu0 0.0
    %931 = vmatprep.mubr.f32.mxu0 0.0
    %932 = vmatmul.mubr.f32.gmra.mxu0 %v865
    %v933 = vpop.f32.mrf.mxu0
    %v934 = vadd.f32 %v860, %v933
    %v935 = vpop.f32.mrf.mxu0
    %936 = vdwg.mxu0
    %vm937 = vcmask 1024
    %938 = vst.msk [vmem:[%s4] sm:$0x3] %vm937, %v934
    // Predicated region
    $region22: #{tpu_custom_call.1} parent=1 // pred_check
      _
    $region23: #{tpu_custom_call.1} parent=1 // pred_check_branch
      %940 = sbr.rel (0) target = $region25
    $region24: #{tpu_custom_call.1} parent=1 // pred_region
      _
    $region25: #{tpu_custom_call.1} parent=1 // pred_fallthru
      _
    // Predicated region
    $region26: #{tpu_custom_call.1} parent=1 // pred_check
      _
    $region27: #{tpu_custom_call.1} parent=1 // pred_check_branch
      %942 = sbr.rel (0) target = $region29
    $region28: #{tpu_custom_call.1} parent=1 // pred_region
      _
    $region29: #{tpu_custom_call.1} parent=1 // pred_fallthru
      _
    %943 = vsyncpa [#allocation4], 1

</llo_original>
